<compile_context>
chip_gen: v5e
topology: v5e:2x2
jax: 0.10.0
libtpu: 0.0.40
codegen_flags: <defaults>
</compile_context>

<pallas_src>
import functools

import jax
import jax.numpy as jnp
from jax.experimental import pallas as pl
from jax.experimental.pallas import tpu as pltpu

LANE = 128  # TPU lane width; fused head output / w4 output padded to this.


# ----------------------------- Pallas kernel ------------------------------ #

def _regressor_kernel(x_ref,
                      w1_ref, b1_ref, w2_ref, b2_ref, w3_ref, b3_ref,
                      w4_ref, b4_ref, wh_ref, bh_ref,
                      out_ref):
    """Fused Regressor forward: 4x (Linear+ReLU) trunk + fused (Linear+tanh) head."""

    def dense_relu(h, w_ref, b_ref):
        z = jnp.dot(h, w_ref[...], preferred_element_type=jnp.float32)
        return jnp.maximum(z + b_ref[...], 0.0)

    h = dense_relu(x_ref[...], w1_ref, b1_ref)   # (M, 512)
    h = dense_relu(h, w2_ref, b2_ref)            # (M, 256)
    h = dense_relu(h, w3_ref, b3_ref)            # (M, 128)
    h = dense_relu(h, w4_ref, b4_ref)            # (M, 128)  cols 64..127 == 0

    # Fused heads, lane-padded to 128 columns (pad cols: tanh(0) == 0).
    out_ref[...] = jnp.tanh(
        jnp.dot(h, wh_ref[...], preferred_element_type=jnp.float32)
        + bh_ref[...])                           # (M, 128)


# ------------------------- parameter construction ------------------------- #

def _init_linear(key, fan_in, fan_out):
    """PyTorch nn.Linear default init: U(-1/sqrt(fan_in), 1/sqrt(fan_in)).

    Weight stored (in_features, out_features) -> y = x @ W + b.
    Bias stored (1, out_features) so it broadcasts inside the kernel.
    """
    kw, kb = jax.random.split(key)
    bound = 1.0 / (fan_in ** 0.5)
    w = jax.random.uniform(kw, (fan_in, fan_out), jnp.float32, -bound, bound)
    b = jax.random.uniform(kb, (1, fan_out), jnp.float32, -bound, bound)
    return w, b


def init_regressor_params(key, x_dim, y_dim):
    """Raw (PyTorch-layout) parameters, used for the reference check."""
    ks = jax.random.split(key, 6)
    w1, b1 = _init_linear(ks[0], x_dim, 512)
    w2, b2 = _init_linear(ks[1], 512, 256)
    w3, b3 = _init_linear(ks[2], 256, 128)
    w4, b4 = _init_linear(ks[3], 128, 64)
    wpx, bpx = _init_linear(ks[4], 64, x_dim)
    wpy, bpy = _init_linear(ks[5], 64, y_dim)
    return dict(w1=w1, b1=b1, w2=w2, b2=b2, w3=w3, b3=b3, w4=w4, b4=b4,
                wpx=wpx, bpx=bpx, wpy=wpy, bpy=bpy)


def pack_regressor_params(raw, x_dim, y_dim):
    """One-time kernel-layout packing (done at init, never per-forward).

    * w4/b4: output dim zero-padded 64 -> 128 (ReLU keeps pad columns at 0).
    * Heads: predict_x | predict_y concatenated along the output axis, then
      zero-padded to 128 output lanes; input dim padded 64 -> 128 with zero
      rows (multiplied by the zero activation columns anyway).
    """
    assert x_dim + y_dim <= LANE, "fused head assumes x_dim + y_dim <= 128"

    w4p = jnp.zeros((128, LANE), jnp.float32).at[:, :64].set(raw["w4"])
    b4p = jnp.zeros((1, LANE), jnp.float32).at[:, :64].set(raw["b4"])

    wh = (jnp.zeros((LANE, LANE), jnp.float32)
          .at[:64, :x_dim].set(raw["wpx"])
          .at[:64, x_dim:x_dim + y_dim].set(raw["wpy"]))
    bh = (jnp.zeros((1, LANE), jnp.float32)
          .at[:, :x_dim].set(raw["bpx"])
          .at[:, x_dim:x_dim + y_dim].set(raw["bpy"]))

    return (raw["w1"], raw["b1"], raw["w2"], raw["b2"],
            raw["w3"], raw["b3"], w4p, b4p, wh, bh)


# ------------------------------ forward pass ------------------------------ #

def regressor_forward(x, packed, *, x_dim, y_dim):
    """latent_x, y = Regressor(x) via one fused, gridless Pallas kernel."""
    M = x.shape[0]
    n_in = 1 + len(packed)

    # Gridless single invocation: whole arrays resident in VMEM, no pipeline
    # scaffolding, no double-buffering of the (static) weights.
    vmem_spec = pl.BlockSpec(memory_space=pltpu.MemorySpace.VMEM)
    out = pl.pallas_call(
        _regressor_kernel,
        out_shape=jax.ShapeDtypeStruct((M, LANE), jnp.float32),
        in_specs=[vmem_spec] * n_in,
        out_specs=vmem_spec,
    )(x, *packed)

    latent_x = out[:, :x_dim]
    y = out[:, x_dim:x_dim + y_dim]
    return latent_x, y


# ---------------------------------- main ----------------------------------- #

if __name__ == "__main__":
    batch = 4
    x_dim = 32
    y_dim = 16

    key = jax.random.PRNGKey(0)
    k_params, k_x = jax.random.split(key)

    raw = init_regressor_params(k_params, x_dim, y_dim)
    packed = pack_regressor_params(raw, x_dim, y_dim)
    x = jax.random.normal(k_x, (batch, x_dim), jnp.float32)

    fwd = jax.jit(functools.partial(regressor_forward, x_dim=x_dim, y_dim=y_dim))
    latent_x, y = fwd(x, packed)
    latent_x, y = jax.block_until_ready((latent_x, y))

    # Pure-JAX reference (same semantics as the PyTorch module) on raw params.
    def ref_forward(x, p):
        h = jax.nn.relu(x @ p["w1"] + p["b1"])
        h = jax.nn.relu(h @ p["w2"] + p["b2"])
        h = jax.nn.relu(h @ p["w3"] + p["b3"])
        h = jax.nn.relu(h @ p["w4"] + p["b4"])
        return jnp.tanh(h @ p["wpx"] + p["bpx"]), jnp.tanh(h @ p["wpy"] + p["bpy"])

    ref_lx, ref_y = ref_forward(x, raw)

    assert latent_x.shape == (batch, x_dim), latent_x.shape
    assert y.shape == (batch, y_dim), y.shape
    assert latent_x.dtype == jnp.float32 and y.dtype == jnp.float32
    assert bool(jnp.all(jnp.isfinite(latent_x))) and bool(jnp.all(jnp.isfinite(y)))
    assert bool(jnp.allclose(latent_x, ref_lx, atol=1e-5, rtol=1e-5))
    assert bool(jnp.allclose(y, ref_y, atol=1e-5, rtol=1e-5))

    print("KERNEL_OK")
</pallas_src>

<mosaic_0001>
module attributes {stable_mosaic.version = 11 : i64} {
  func.func @_regressor_kernel(%arg0: memref<4x32xf32, #tpu.memory_space<vmem>>, %arg1: memref<32x512xf32, #tpu.memory_space<vmem>>, %arg2: memref<1x512xf32, #tpu.memory_space<vmem>>, %arg3: memref<512x256xf32, #tpu.memory_space<vmem>>, %arg4: memref<1x256xf32, #tpu.memory_space<vmem>>, %arg5: memref<256x128xf32, #tpu.memory_space<vmem>>, %arg6: memref<1x128xf32, #tpu.memory_space<vmem>>, %arg7: memref<128x128xf32, #tpu.memory_space<vmem>>, %arg8: memref<1x128xf32, #tpu.memory_space<vmem>>, %arg9: memref<128x128xf32, #tpu.memory_space<vmem>>, %arg10: memref<1x128xf32, #tpu.memory_space<vmem>>, %arg11: memref<4x128xf32, #tpu.memory_space<vmem>>) attributes {dimension_semantics = [], scalar_prefetch = 0 : i64, scratch_operands = 0 : i64, tpu.core_type = #tpu.core_type<tc>} {
    %c0 = arith.constant 0 : index
    %c0_0 = arith.constant 0 : index
    %0 = vector.load %arg0[%c0, %c0_0] : memref<4x32xf32, #tpu.memory_space<vmem>>, vector<4x32xf32>
    %c0_1 = arith.constant 0 : index
    %c0_2 = arith.constant 0 : index
    %1 = vector.load %arg1[%c0_1, %c0_2] : memref<32x512xf32, #tpu.memory_space<vmem>>, vector<32x512xf32>
    %cst = arith.constant dense<0.000000e+00> : vector<4x512xf32>
    %2 = tpu.matmul %0, %1, %cst {dimension_numbers = #tpu.dot_dimension_numbers<[1], [0], [0], [1], [0, 0, 1, 1], [], []>} : vector<4x32xf32>, vector<32x512xf32>, vector<4x512xf32> -> vector<4x512xf32>
    %c0_3 = arith.constant 0 : index
    %c0_4 = arith.constant 0 : index
    %3 = vector.load %arg2[%c0_3, %c0_4] : memref<1x512xf32, #tpu.memory_space<vmem>>, vector<1x512xf32>
    %4 = vector.broadcast %3 : vector<1x512xf32> to vector<4x512xf32>
    %5 = arith.addf %2, %4 : vector<4x512xf32>
    %cst_5 = arith.constant 0.000000e+00 : f32
    %6 = vector.broadcast %cst_5 : f32 to vector<4x512xf32>
    %7 = arith.maximumf %5, %6 : vector<4x512xf32>
    %c0_6 = arith.constant 0 : index
    %c0_7 = arith.constant 0 : index
    %8 = vector.load %arg3[%c0_6, %c0_7] : memref<512x256xf32, #tpu.memory_space<vmem>>, vector<512x256xf32>
    %cst_8 = arith.constant dense<0.000000e+00> : vector<4x256xf32>
    %9 = tpu.matmul %7, %8, %cst_8 {dimension_numbers = #tpu.dot_dimension_numbers<[1], [0], [0], [1], [0, 0, 1, 1], [], []>} : vector<4x512xf32>, vector<512x256xf32>, vector<4x256xf32> -> vector<4x256xf32>
    %c0_9 = arith.constant 0 : index
    %c0_10 = arith.constant 0 : index
    %10 = vector.load %arg4[%c0_9, %c0_10] : memref<1x256xf32, #tpu.memory_space<vmem>>, vector<1x256xf32>
    %11 = vector.broadcast %10 : vector<1x256xf32> to vector<4x256xf32>
    %12 = arith.addf %9, %11 : vector<4x256xf32>
    %cst_11 = arith.constant 0.000000e+00 : f32
    %13 = vector.broadcast %cst_11 : f32 to vector<4x256xf32>
    %14 = arith.maximumf %12, %13 : vector<4x256xf32>
    %c0_12 = arith.constant 0 : index
    %c0_13 = arith.constant 0 : index
    %15 = vector.load %arg5[%c0_12, %c0_13] : memref<256x128xf32, #tpu.memory_space<vmem>>, vector<256x128xf32>
    %cst_14 = arith.constant dense<0.000000e+00> : vector<4x128xf32>
    %16 = tpu.matmul %14, %15, %cst_14 {dimension_numbers = #tpu.dot_dimension_numbers<[1], [0], [0], [1], [0, 0, 1, 1], [], []>} : vector<4x256xf32>, vector<256x128xf32>, vector<4x128xf32> -> vector<4x128xf32>
    %c0_15 = arith.constant 0 : index
    %c0_16 = arith.constant 0 : index
    %17 = vector.load %arg6[%c0_15, %c0_16] : memref<1x128xf32, #tpu.memory_space<vmem>>, vector<1x128xf32>
    %18 = vector.broadcast %17 : vector<1x128xf32> to vector<4x128xf32>
    %19 = arith.addf %16, %18 : vector<4x128xf32>
    %cst_17 = arith.constant 0.000000e+00 : f32
    %20 = vector.broadcast %cst_17 : f32 to vector<4x128xf32>
    %21 = arith.maximumf %19, %20 : vector<4x128xf32>
    %c0_18 = arith.constant 0 : index
    %c0_19 = arith.constant 0 : index
    %22 = vector.load %arg7[%c0_18, %c0_19] : memref<128x128xf32, #tpu.memory_space<vmem>>, vector<128x128xf32>
    %cst_20 = arith.constant dense<0.000000e+00> : vector<4x128xf32>
    %23 = tpu.matmul %21, %22, %cst_20 {dimension_numbers = #tpu.dot_dimension_numbers<[1], [0], [0], [1], [0, 0, 1, 1], [], []>} : vector<4x128xf32>, vector<128x128xf32>, vector<4x128xf32> -> vector<4x128xf32>
    %c0_21 = arith.constant 0 : index
    %c0_22 = arith.constant 0 : index
    %24 = vector.load %arg8[%c0_21, %c0_22] : memref<1x128xf32, #tpu.memory_space<vmem>>, vector<1x128xf32>
    %25 = vector.broadcast %24 : vector<1x128xf32> to vector<4x128xf32>
    %26 = arith.addf %23, %25 : vector<4x128xf32>
    %cst_23 = arith.constant 0.000000e+00 : f32
    %27 = vector.broadcast %cst_23 : f32 to vector<4x128xf32>
    %28 = arith.maximumf %26, %27 : vector<4x128xf32>
    %c0_24 = arith.constant 0 : index
    %c0_25 = arith.constant 0 : index
    %29 = vector.load %arg9[%c0_24, %c0_25] : memref<128x128xf32, #tpu.memory_space<vmem>>, vector<128x128xf32>
    %cst_26 = arith.constant dense<0.000000e+00> : vector<4x128xf32>
    %30 = tpu.matmul %28, %29, %cst_26 {dimension_numbers = #tpu.dot_dimension_numbers<[1], [0], [0], [1], [0, 0, 1, 1], [], []>} : vector<4x128xf32>, vector<128x128xf32>, vector<4x128xf32> -> vector<4x128xf32>
    %c0_27 = arith.constant 0 : index
    %c0_28 = arith.constant 0 : index
    %31 = vector.load %arg10[%c0_27, %c0_28] : memref<1x128xf32, #tpu.memory_space<vmem>>, vector<1x128xf32>
    %32 = vector.broadcast %31 : vector<1x128xf32> to vector<4x128xf32>
    %33 = arith.addf %30, %32 : vector<4x128xf32>
    %34 = math.tanh %33 : vector<4x128xf32>
    %c0_29 = arith.constant 0 : index
    %c0_30 = arith.constant 0 : index
    %35 = vector.load %arg11[%c0_29, %c0_30] : memref<4x128xf32, #tpu.memory_space<vmem>>, vector<4x128xf32>
    tpu.vector_store %arg11[%c0_29, %c0_30], %34 {strides = array<i32>} : memref<4x128xf32, #tpu.memory_space<vmem>>, vector<4x128xf32>,
    return
  }
}

</mosaic_0001>

<llo_original>
// kernel: regressor_forward.1
$region0: #{regressor_forward.1}
  #allocation0 [shape = 'u32[]', space=smem, size = 0x4, offset = 0x4, fixed_abs, tag = 'smem constant byte address 0x4 - core index']
  #allocation1 [shape = 'u32[72,128]{1,0:T(1,128)}', space=vmem, size = 0x9000, scoped, tag = 'internal scratch']
  %s0 = inlined_call_operand.hbm [shape: f32[4,32], index: 0, kind: input, shape index: {}]
  %s1 = inlined_call_operand.hbm [shape: f32[32,512], index: 1, kind: input, shape index: {}]
  %s2 = inlined_call_operand.hbm [shape: f32[1,512], index: 2, kind: input, shape index: {}]
  %s3 = inlined_call_operand.hbm [shape: f32[512,256], index: 3, kind: input, shape index: {}]
  %s4 = inlined_call_operand.vmem [shape: f32[1,256], index: 4, kind: input, shape index: {}]
  %s5 = inlined_call_operand.hbm [shape: f32[256,128], index: 5, kind: input, shape index: {}]
  %s6 = inlined_call_operand.vmem [shape: f32[1,128], index: 6, kind: input, shape index: {}]
  %s7 = inlined_call_operand.hbm [shape: f32[128,128], index: 7, kind: input, shape index: {}]
  %s8 = inlined_call_operand.vmem [shape: f32[1,128], index: 8, kind: input, shape index: {}]
  %s9 = inlined_call_operand.hbm [shape: f32[128,128], index: 9, kind: input, shape index: {}]
  %s10 = inlined_call_operand.vmem [shape: f32[1,128], index: 10, kind: input, shape index: {}]
  %s11 = inlined_call_operand.vmem [shape: f32[4,128], index: 11, kind: output, shape index: {}]
  %s12 = sld [smem:[#allocation0]]
  $region82: #{regressor_forward.1} parent=0
    _
  %s14 = ssub.s32 1, %s12
  %s15 = scalar_select 0, %s14, %s12
  $region1: #{regressor_forward.1} parent=0
    #allocation2 [shape = 'u8[2048]{0}', space=vmem, size = 0x800, scoped, tag = 'input window, operand 0, single buffered']
    #allocation3 [shape = 's32[1]{0}', space=sflag, size = 0x4, scoped, tag = 'scoped memory for regressor_forward.1']
    #allocation4 [shape = 'u8[65536]{0}', space=vmem, size = 0x10000, scoped, tag = 'input window, operand 1, single buffered']
    #allocation5 [shape = 's32[1]{0}', space=sflag, size = 0x4, scoped, tag = 'scoped memory for regressor_forward.1']
    #allocation6 [shape = 'u8[2048]{0}', space=vmem, size = 0x800, scoped, tag = 'input window, operand 2, single buffered']
    #allocation7 [shape = 'u8[524288]{0}', space=vmem, size = 0x80000, scoped, tag = 'input window, operand 3, single buffered']
    #allocation8 [shape = 's32[1]{0}', space=sflag, size = 0x4, scoped, tag = 'scoped memory for regressor_forward.1']
    #allocation9 [shape = 'u8[131072]{0}', space=vmem, size = 0x20000, scoped, tag = 'input window, operand 5, single buffered']
    #allocation10 [shape = 'u8[65536]{0}', space=vmem, size = 0x10000, scoped, tag = 'input window, operand 7, single buffered']
    #allocation11 [shape = 's32[1]{0}', space=sflag, size = 0x4, scoped, tag = 'scoped memory for regressor_forward.1']
    #allocation12 [shape = 'u8[65536]{0}', space=vmem, size = 0x10000, scoped, tag = 'input window, operand 9, single buffered']
    %16 = vsyncpa [#allocation3], 0
    %17 = vsyncpa [#allocation5], 0
    %18 = vsyncpa [#allocation8], 0
    %19 = vsyncpa [#allocation11], 0
    // Predicated region
    $region2: #{regressor_forward.1} parent=1 // pred_check
      _
    $region3: #{regressor_forward.1} parent=1 // pred_check_branch
      %21 = sbr.rel (0) target = $region5
    $region4: #{regressor_forward.1} parent=1 // pred_region
      %23 = vsyncadd [#allocation3], 0
      %s25 = sshll.u32 %s0, 4
      %s26 = int_to_ptr.hbm [resolvable:$true] %s25
      %s27 = sshll.u32 [#allocation2], 4
      %s28 = int_to_ptr.vmem [resolvable:$true] %s27
      %30 = dma.hbm_to_vmem [thread:$0]  %s26, 64, %s28, [#allocation3]
    $region5: #{regressor_forward.1} parent=1 // pred_fallthru
      _
    // Predicated region
    $region6: #{regressor_forward.1} parent=1 // pred_check
      _
    $region7: #{regressor_forward.1} parent=1 // pred_check_branch
      %32 = sbr.rel (0) target = $region9
    $region8: #{regressor_forward.1} parent=1 // pred_region
      %34 = vsyncadd [#allocation5], 0
      %s35 = sshll.u32 %s1, 4
      %s36 = int_to_ptr.hbm [resolvable:$true] %s35
      %s37 = sshll.u32 [#allocation4], 4
      %s38 = int_to_ptr.vmem [resolvable:$true] %s37
      %43 = dma.hbm_to_vmem [thread:$0]  %s36, 2048, %s38, [#allocation5], 512, 512, 32
    $region9: #{regressor_forward.1} parent=1 // pred_fallthru
      _
    // Predicated region
    $region10: #{regressor_forward.1} parent=1 // pred_check
      _
    $region11: #{regressor_forward.1} parent=1 // pred_check_branch
      %45 = sbr.rel (0) target = $region13
    $region12: #{regressor_forward.1} parent=1 // pred_region
      %47 = vsyncadd [#allocation5], 0
      %s49 = sshll.u32 %s2, 4
      %s50 = int_to_ptr.hbm [resolvable:$true] %s49
      %s51 = sshll.u32 [#allocation6], 4
      %s52 = int_to_ptr.vmem [resolvable:$true] %s51
      %54 = dma.hbm_to_vmem [thread:$0]  %s50, 64, %s52, [#allocation5]
    $region13: #{regressor_forward.1} parent=1 // pred_fallthru
      _
    // Predicated region
    $region14: #{regressor_forward.1} parent=1 // pred_check
      _
    $region15: #{regressor_forward.1} parent=1 // pred_check_branch
      %56 = sbr.rel (0) target = $region17
    $region16: #{regressor_forward.1} parent=1 // pred_region
      %58 = vsyncadd [#allocation8], 0
      %s59 = sshll.u32 %s3, 4
      %s60 = int_to_ptr.hbm [resolvable:$true] %s59
      %s61 = sshll.u32 [#allocation7], 4
      %s62 = int_to_ptr.vmem [resolvable:$true] %s61
      %67 = dma.hbm_to_vmem [thread:$0]  %s60, 16384, %s62, [#allocation8], 256, 256, 16
    $region17: #{regressor_forward.1} parent=1 // pred_fallthru
      _
    // Predicated region
    $region18: #{regressor_forward.1} parent=1 // pred_check
      _
    $region19: #{regressor_forward.1} parent=1 // pred_check_branch
      %69 = sbr.rel (0) target = $region21
    $region20: #{regressor_forward.1} parent=1 // pred_region
      _
    $region21: #{regressor_forward.1} parent=1 // pred_fallthru
      _
    // Predicated region
    $region22: #{regressor_forward.1} parent=1 // pred_check
      _
    $region23: #{regressor_forward.1} parent=1 // pred_check_branch
      %71 = sbr.rel (0) target = $region25
    $region24: #{regressor_forward.1} parent=1 // pred_region
      %73 = vsyncadd [#allocation8], 0
      %s74 = sshll.u32 %s5, 4
      %s75 = int_to_ptr.hbm [resolvable:$true] %s74
      %s76 = sshll.u32 [#allocation9], 4
      %s77 = int_to_ptr.vmem [resolvable:$true] %s76
      %82 = dma.hbm_to_vmem [thread:$0]  %s75, 4096, %s77, [#allocation8], 128, 128, 8
    $region25: #{regressor_forward.1} parent=1 // pred_fallthru
      _
    // Predicated region
    $region26: #{regressor_forward.1} parent=1 // pred_check
      _
    $region27: #{regressor_forward.1} parent=1 // pred_check_branch
      %84 = sbr.rel (0) target = $region29
    $region28: #{regressor_forward.1} parent=1 // pred_region
      _
    $region29: #{regressor_forward.1} parent=1 // pred_fallthru
      _
    // Predicated region
    $region30: #{regressor_forward.1} parent=1 // pred_check
      _
    $region31: #{regressor_forward.1} parent=1 // pred_check_branch
      %86 = sbr.rel (0) target = $region33
    $region32: #{regressor_forward.1} parent=1 // pred_region
      %88 = vsyncadd [#allocation11], 0
      %s89 = sshll.u32 %s7, 4
      %s90 = int_to_ptr.hbm [resolvable:$true] %s89
      %s91 = sshll.u32 [#allocation10], 4
      %s92 = int_to_ptr.vmem [resolvable:$true] %s91
      %97 = dma.hbm_to_vmem [thread:$0]  %s90, 2048, %s92, [#allocation11], 128, 128, 8
    $region33: #{regressor_forward.1} parent=1 // pred_fallthru
      _
    // Predicated region
    $region34: #{regressor_forward.1} parent=1 // pred_check
      _
    $region35: #{regressor_forward.1} parent=1 // pred_check_branch
      %99 = sbr.rel (0) target = $region37
    $region36: #{regressor_forward.1} parent=1 // pred_region
      _
    $region37: #{regressor_forward.1} parent=1 // pred_fallthru
      _
    // Predicated region
    $region38: #{regressor_forward.1} parent=1 // pred_check
      _
    $region39: #{regressor_forward.1} parent=1 // pred_check_branch
      %101 = sbr.rel (0) target = $region41
    $region40: #{regressor_forward.1} parent=1 // pred_region
      %103 = vsyncadd [#allocation11], 0
      %s104 = sshll.u32 %s9, 4
      %s105 = int_to_ptr.hbm [resolvable:$true] %s104
      %s106 = sshll.u32 [#allocation12], 4
      %s107 = int_to_ptr.vmem [resolvable:$true] %s106
      %112 = dma.hbm_to_vmem [thread:$0]  %s105, 2048, %s107, [#allocation11], 128, 128, 8
    $region41: #{regressor_forward.1} parent=1 // pred_fallthru
      _
    // Predicated region
    $region42: #{regressor_forward.1} parent=1 // pred_check
      _
    $region43: #{regressor_forward.1} parent=1 // pred_check_branch
      %114 = sbr.rel (0) target = $region45
    $region44: #{regressor_forward.1} parent=1 // pred_region
      _
    $region45: #{regressor_forward.1} parent=1 // pred_fallthru
      _
    // Predicated region
    $region46: #{regressor_forward.1} parent=1 // pred_check
      _
    $region47: #{regressor_forward.1} parent=1 // pred_check_branch
      %116 = sbr.rel (0) target = $region49
    $region48: #{regressor_forward.1} parent=1 // pred_region
      %118 = dma.done [#allocation3], 64
    $region49: #{regressor_forward.1} parent=1 // pred_fallthru
      _
    // Predicated region
    $region50: #{regressor_forward.1} parent=1 // pred_check
      _
    $region51: #{regressor_forward.1} parent=1 // pred_check_branch
      %120 = sbr.rel (0) target = $region53
    $region52: #{regressor_forward.1} parent=1 // pred_region
      %122 = dma.done [#allocation5], 2048
    $region53: #{regressor_forward.1} parent=1 // pred_fallthru
      _
    // Predicated region
    $region54: #{regressor_forward.1} parent=1 // pred_check
      _
    $region55: #{regressor_forward.1} parent=1 // pred_check_branch
      %124 = sbr.rel (0) target = $region57
    $region56: #{regressor_forward.1} parent=1 // pred_region
      %126 = dma.done [#allocation5], 64
    $region57: #{regressor_forward.1} parent=1 // pred_fallthru
      _
    // Predicated region
    $region58: #{regressor_forward.1} parent=1 // pred_check
      _
    $region59: #{regressor_forward.1} parent=1 // pred_check_branch
      %128 = sbr.rel (0) target = $region61
    $region60: #{regressor_forward.1} parent=1 // pred_region
      %130 = dma.done [#allocation8], 16384
    $region61: #{regressor_forward.1} parent=1 // pred_fallthru
      _
    // Predicated region
    $region62: #{regressor_forward.1} parent=1 // pred_check
      _
    $region63: #{regressor_forward.1} parent=1 // pred_check_branch
      %132 = sbr.rel (0) target = $region65
    $region64: #{regressor_forward.1} parent=1 // pred_region
      %134 = dma.done [#allocation8], 4096
    $region65: #{regressor_forward.1} parent=1 // pred_fallthru
      _
    // Predicated region
    $region66: #{regressor_forward.1} parent=1 // pred_check
      _
    $region67: #{regressor_forward.1} parent=1 // pred_check_branch
      %136 = sbr.rel (0) target = $region69
    $region68: #{regressor_forward.1} parent=1 // pred_region
      %138 = dma.done [#allocation11], 2048
    $region69: #{regressor_forward.1} parent=1 // pred_fallthru
      _
    // Predicated region
    $region70: #{regressor_forward.1} parent=1 // pred_check
      _
    $region71: #{regressor_forward.1} parent=1 // pred_check_branch
      %140 = sbr.rel (0) target = $region73
    $region72: #{regressor_forward.1} parent=1 // pred_region
      %142 = dma.done [#allocation11], 2048
    $region73: #{regressor_forward.1} parent=1 // pred_fallthru
      _
    %v143 = vld [vmem:[#allocation2] sm:$0xf]
    %v144 = vld [vmem:[#allocation4] sm:$0xff]
    %v145 = vld [vmem:[#allocation4 + $0x8] sm:$0xff]
    %v146 = vld [vmem:[#allocation4 + $0x10] sm:$0xff]
    %v147 = vld [vmem:[#allocation4 + $0x18] sm:$0xff]
    %v148 = vld [vmem:[#allocation4 + $0x20] sm:$0xff]
    %v149 = vld [vmem:[#allocation4 + $0x28] sm:$0xff]
    %v150 = vld [vmem:[#allocation4 + $0x30] sm:$0xff]
    %v151 = vld [vmem:[#allocation4 + $0x38] sm:$0xff]
    %v152 = vld [vmem:[#allocation4 + $0x40] sm:$0xff]
    %v153 = vld [vmem:[#allocation4 + $0x48] sm:$0xff]
    %v154 = vld [vmem:[#allocation4 + $0x50] sm:$0xff]
    %v155 = vld [vmem:[#allocation4 + $0x58] sm:$0xff]
    %v156 = vld [vmem:[#allocation4 + $0x60] sm:$0xff]
    %v157 = vld [vmem:[#allocation4 + $0x68] sm:$0xff]
    %v158 = vld [vmem:[#allocation4 + $0x70] sm:$0xff]
    %v159 = vld [vmem:[#allocation4 + $0x78] sm:$0xff]
    %v160 = vld [vmem:[#allocation6] sm:$0xf]
    %v162 = vperm.slane %v160, 0
    %v163 = vperm.slane %v160, 1
    %v164 = vperm.slane %v160, 2
    %v165 = vperm.slane %v160, 3
    %vm170 = vcmask 261120
    %v172 = vsel %vm170, %v143, 0
    %174 = vmatpush.msra.mxu0 0.0
    %175 = vmatpush.msra.mxu0 0.0
    %176 = vmatpush.msra.mxu0 0.0
    %177 = vmatpush.msra.mxu0 0.0
    %178 = vmatpush.msra.mxu0 0.0
    %179 = vmatpush.msra.mxu0 0.0
    %180 = vmatpush.msra.mxu0 0.0
    %181 = vmatpush.msra.mxu0 0.0
    %182 = vmatpush.msra.mxu0 0.0
    %183 = vmatpush.msra.mxu0 0.0
    %184 = vmatpush.msra.mxu0 0.0
    %185 = vmatpush.msra.mxu0 0.0
    %186 = vmatpush.msra.mxu0 %v156
    %187 = vmatpush.msra.mxu0 %v152
    %188 = vmatpush.msra.mxu0 %v148
    %189 = vmatpush.msra.mxu0 %v144
    %190 = vmatmul.f32.gmra.mxu0 %v172
    %v191 = vpop.f32.mrf.mxu0
    %v192 = vadd.f32 %v162, %v191
    %193 = vdwg.mxu0
    %194 = vmatpush.msra.mxu0 0.0
    %195 = vmatpush.msra.mxu0 0.0
    %196 = vmatpush.msra.mxu0 0.0
    %197 = vmatpush.msra.mxu0 0.0
    %198 = vmatpush.msra.mxu0 0.0
    %199 = vmatpush.msra.mxu0 0.0
    %200 = vmatpush.msra.mxu0 0.0
    %201 = vmatpush.msra.mxu0 0.0
    %202 = vmatpush.msra.mxu0 0.0
    %203 = vmatpush.msra.mxu0 0.0
    %204 = vmatpush.msra.mxu0 0.0
    %205 = vmatpush.msra.mxu0 0.0
    %206 = vmatpush.msra.mxu0 %v157
    %207 = vmatpush.msra.mxu0 %v153
    %208 = vmatpush.msra.mxu0 %v149
    %209 = vmatpush.msra.mxu0 %v145
    %210 = vmatmul.f32.gmra.mxu0 %v172
    %v211 = vpop.f32.mrf.mxu0
    %v212 = vadd.f32 %v163, %v211
    %213 = vdwg.mxu0
    %214 = vmatpush.msra.mxu0 0.0
    %215 = vmatpush.msra.mxu0 0.0
    %216 = vmatpush.msra.mxu0 0.0
    %217 = vmatpush.msra.mxu0 0.0
    %218 = vmatpush.msra.mxu0 0.0
    %219 = vmatpush.msra.mxu0 0.0
    %220 = vmatpush.msra.mxu0 0.0
    %221 = vmatpush.msra.mxu0 0.0
    %222 = vmatpush.msra.mxu0 0.0
    %223 = vmatpush.msra.mxu0 0.0
    %224 = vmatpush.msra.mxu0 0.0
    %225 = vmatpush.msra.mxu0 0.0
    %226 = vmatpush.msra.mxu0 %v158
    %227 = vmatpush.msra.mxu0 %v154
    %228 = vmatpush.msra.mxu0 %v150
    %229 = vmatpush.msra.mxu0 %v146
    %230 = vmatmul.f32.gmra.mxu0 %v172
    %v231 = vpop.f32.mrf.mxu0
    %v232 = vadd.f32 %v164, %v231
    %233 = vdwg.mxu0
    %234 = vmatpush.msra.mxu0 0.0
    %235 = vmatpush.msra.mxu0 0.0
    %236 = vmatpush.msra.mxu0 0.0
    %237 = vmatpush.msra.mxu0 0.0
    %238 = vmatpush.msra.mxu0 0.0
    %239 = vmatpush.msra.mxu0 0.0
    %240 = vmatpush.msra.mxu0 0.0
    %241 = vmatpush.msra.mxu0 0.0
    %242 = vmatpush.msra.mxu0 0.0
    %243 = vmatpush.msra.mxu0 0.0
    %244 = vmatpush.msra.mxu0 0.0
    %245 = vmatpush.msra.mxu0 0.0
    %246 = vmatpush.msra.mxu0 %v159
    %247 = vmatpush.msra.mxu0 %v155
    %248 = vmatpush.msra.mxu0 %v151
    %249 = vmatpush.msra.mxu0 %v147
    %250 = vmatmul.f32.gmra.mxu0 %v172
    %v251 = vpop.f32.mrf.mxu0
    %v252 = vadd.f32 %v165, %v251
    %253 = vdwg.mxu0
    %v254 = vmax.f32 %v192, 0.0
    %v255 = vmax.f32 %v212, 0.0
    %v256 = vmax.f32 %v232, 0.0
    %v257 = vmax.f32 %v252, 0.0
    %v258 = vld [vmem:[#allocation7] sm:$0xff]
    %v259 = vld [vmem:[#allocation7 + $0x8] sm:$0xff]
    %v260 = vld [vmem:[#allocation7 + $0x10] sm:$0xff]
    %v261 = vld [vmem:[#allocation7 + $0x18] sm:$0xff]
    %v262 = vld [vmem:[#allocation7 + $0x20] sm:$0xff]
    %v263 = vld [vmem:[#allocation7 + $0x28] sm:$0xff]
    %v264 = vld [vmem:[#allocation7 + $0x30] sm:$0xff]
    %v265 = vld [vmem:[#allocation7 + $0x38] sm:$0xff]
    %v266 = vld [vmem:[#allocation7 + $0x40] sm:$0xff]
    %v267 = vld [vmem:[#allocation7 + $0x48] sm:$0xff]
    %v268 = vld [vmem:[#allocation7 + $0x50] sm:$0xff]
    %v269 = vld [vmem:[#allocation7 + $0x58] sm:$0xff]
    %v270 = vld [vmem:[#allocation7 + $0x60] sm:$0xff]
    %v271 = vld [vmem:[#allocation7 + $0x68] sm:$0xff]
    %v272 = vld [vmem:[#allocation7 + $0x70] sm:$0xff]
    %v273 = vld [vmem:[#allocation7 + $0x78] sm:$0xff]
    %v274 = vld [vmem:[#allocation7 + $0x80] sm:$0xff]
    %v275 = vld [vmem:[#allocation7 + $0x88] sm:$0xff]
    %v276 = vld [vmem:[#allocation7 + $0x90] sm:$0xff]
    %v277 = vld [vmem:[#allocation7 + $0x98] sm:$0xff]
    %v278 = vld [vmem:[#allocation7 + $0xa0] sm:$0xff]
    %v279 = vld [vmem:[#allocation7 + $0xa8] sm:$0xff]
    %v280 = vld [vmem:[#allocation7 + $0xb0] sm:$0xff]
    %v281 = vld [vmem:[#allocation7 + $0xb8] sm:$0xff]
    %v282 = vld [vmem:[#allocation7 + $0xc0] sm:$0xff]
    %v283 = vld [vmem:[#allocation7 + $0xc8] sm:$0xff]
    %v284 = vld [vmem:[#allocation7 + $0xd0] sm:$0xff]
    %v285 = vld [vmem:[#allocation7 + $0xd8] sm:$0xff]
    %v286 = vld [vmem:[#allocation7 + $0xe0] sm:$0xff]
    %v287 = vld [vmem:[#allocation7 + $0xe8] sm:$0xff]
    %v288 = vld [vmem:[#allocation7 + $0xf0] sm:$0xff]
    %v289 = vld [vmem:[#allocation7 + $0xf8] sm:$0xff]
    %v290 = vld [vmem:[#allocation7 + $0x100] sm:$0xff]
    %v291 = vld [vmem:[#allocation7 + $0x108] sm:$0xff]
    %v292 = vld [vmem:[#allocation7 + $0x110] sm:$0xff]
    %v293 = vld [vmem:[#allocation7 + $0x118] sm:$0xff]
    %v294 = vld [vmem:[#allocation7 + $0x120] sm:$0xff]
    %v295 = vld [vmem:[#allocation7 + $0x128] sm:$0xff]
    %v296 = vld [vmem:[#allocation7 + $0x130] sm:$0xff]
    %v297 = vld [vmem:[#allocation7 + $0x138] sm:$0xff]
    %v298 = vld [vmem:[#allocation7 + $0x140] sm:$0xff]
    %v299 = vld [vmem:[#allocation7 + $0x148] sm:$0xff]
    %v300 = vld [vmem:[#allocation7 + $0x150] sm:$0xff]
    %v301 = vld [vmem:[#allocation7 + $0x158] sm:$0xff]
    %v302 = vld [vmem:[#allocation7 + $0x160] sm:$0xff]
    %v303 = vld [vmem:[#allocation7 + $0x168] sm:$0xff]
    %v304 = vld [vmem:[#allocation7 + $0x170] sm:$0xff]
    %v305 = vld [vmem:[#allocation7 + $0x178] sm:$0xff]
    %v306 = vld [vmem:[#allocation7 + $0x180] sm:$0xff]
    %v307 = vld [vmem:[#allocation7 + $0x188] sm:$0xff]
    %v308 = vld [vmem:[#allocation7 + $0x190] sm:$0xff]
    %v309 = vld [vmem:[#allocation7 + $0x198] sm:$0xff]
    %v310 = vld [vmem:[#allocation7 + $0x1a0] sm:$0xff]
    %v311 = vld [vmem:[#allocation7 + $0x1a8] sm:$0xff]
    %v312 = vld [vmem:[#allocation7 + $0x1b0] sm:$0xff]
    %v313 = vld [vmem:[#allocation7 + $0x1b8] sm:$0xff]
    %v314 = vld [vmem:[#allocation7 + $0x1c0] sm:$0xff]
    %v315 = vld [vmem:[#allocation7 + $0x1c8] sm:$0xff]
    %v316 = vld [vmem:[#allocation7 + $0x1d0] sm:$0xff]
    %v317 = vld [vmem:[#allocation7 + $0x1d8] sm:$0xff]
    %v318 = vld [vmem:[#allocation7 + $0x1e0] sm:$0xff]
    %v319 = vld [vmem:[#allocation7 + $0x1e8] sm:$0xff]
    %v320 = vld [vmem:[#allocation7 + $0x1f0] sm:$0xff]
    %v321 = vld [vmem:[#allocation7 + $0x1f8] sm:$0xff]
    %v322 = vld [vmem:[#allocation7 + $0x200] sm:$0xff]
    %v323 = vld [vmem:[#allocation7 + $0x208] sm:$0xff]
    %v324 = vld [vmem:[#allocation7 + $0x210] sm:$0xff]
    %v325 = vld [vmem:[#allocation7 + $0x218] sm:$0xff]
    %v326 = vld [vmem:[#allocation7 + $0x220] sm:$0xff]
    %v327 = vld [vmem:[#allocation7 + $0x228] sm:$0xff]
    %v328 = vld [vmem:[#allocation7 + $0x230] sm:$0xff]
    %v329 = vld [vmem:[#allocation7 + $0x238] sm:$0xff]
    %v330 = vld [vmem:[#allocation7 + $0x240] sm:$0xff]
    %v331 = vld [vmem:[#allocation7 + $0x248] sm:$0xff]
    %v332 = vld [vmem:[#allocation7 + $0x250] sm:$0xff]
    %v333 = vld [vmem:[#allocation7 + $0x258] sm:$0xff]
    %v334 = vld [vmem:[#allocation7 + $0x260] sm:$0xff]
    %v335 = vld [vmem:[#allocation7 + $0x268] sm:$0xff]
    %v336 = vld [vmem:[#allocation7 + $0x270] sm:$0xff]
    %v337 = vld [vmem:[#allocation7 + $0x278] sm:$0xff]
    %v338 = vld [vmem:[#allocation7 + $0x280] sm:$0xff]
    %v339 = vld [vmem:[#allocation7 + $0x288] sm:$0xff]
    %v340 = vld [vmem:[#allocation7 + $0x290] sm:$0xff]
    %v341 = vld [vmem:[#allocation7 + $0x298] sm:$0xff]
    %v342 = vld [vmem:[#allocation7 + $0x2a0] sm:$0xff]
    %v343 = vld [vmem:[#allocation7 + $0x2a8] sm:$0xff]
    %v344 = vld [vmem:[#allocation7 + $0x2b0] sm:$0xff]
    %v345 = vld [vmem:[#allocation7 + $0x2b8] sm:$0xff]
    %v346 = vld [vmem:[#allocation7 + $0x2c0] sm:$0xff]
    %v347 = vld [vmem:[#allocation7 + $0x2c8] sm:$0xff]
    %v348 = vld [vmem:[#allocation7 + $0x2d0] sm:$0xff]
    %v349 = vld [vmem:[#allocation7 + $0x2d8] sm:$0xff]
    %v350 = vld [vmem:[#allocation7 + $0x2e0] sm:$0xff]
    %v351 = vld [vmem:[#allocation7 + $0x2e8] sm:$0xff]
    %v352 = vld [vmem:[#allocation7 + $0x2f0] sm:$0xff]
    %v353 = vld [vmem:[#allocation7 + $0x2f8] sm:$0xff]
    %v354 = vld [vmem:[#allocation7 + $0x300] sm:$0xff]
    %v355 = vld [vmem:[#allocation7 + $0x308] sm:$0xff]
    %v356 = vld [vmem:[#allocation7 + $0x310] sm:$0xff]
    %v357 = vld [vmem:[#allocation7 + $0x318] sm:$0xff]
    %v358 = vld [vmem:[#allocation7 + $0x320] sm:$0xff]
    %v359 = vld [vmem:[#allocation7 + $0x328] sm:$0xff]
    %v360 = vld [vmem:[#allocation7 + $0x330] sm:$0xff]
    %v361 = vld [vmem:[#allocation7 + $0x338] sm:$0xff]
    %v362 = vld [vmem:[#allocation7 + $0x340] sm:$0xff]
    %v363 = vld [vmem:[#allocation7 + $0x348] sm:$0xff]
    %v364 = vld [vmem:[#allocation7 + $0x350] sm:$0xff]
    %v365 = vld [vmem:[#allocation7 + $0x358] sm:$0xff]
    %v366 = vld [vmem:[#allocation7 + $0x360] sm:$0xff]
    %v367 = vld [vmem:[#allocation7 + $0x368] sm:$0xff]
    %v368 = vld [vmem:[#allocation7 + $0x370] sm:$0xff]
    %v369 = vld [vmem:[#allocation7 + $0x378] sm:$0xff]
    %v370 = vld [vmem:[#allocation7 + $0x380] sm:$0xff]
    %v371 = vld [vmem:[#allocation7 + $0x388] sm:$0xff]
    %v372 = vld [vmem:[#allocation7 + $0x390] sm:$0xff]
    %v373 = vld [vmem:[#allocation7 + $0x398] sm:$0xff]
    %v374 = vld [vmem:[#allocation7 + $0x3a0] sm:$0xff]
    %v375 = vld [vmem:[#allocation7 + $0x3a8] sm:$0xff]
    %v376 = vld [vmem:[#allocation7 + $0x3b0] sm:$0xff]
    %v377 = vld [vmem:[#allocation7 + $0x3b8] sm:$0xff]
    %v378 = vld [vmem:[#allocation7 + $0x3c0] sm:$0xff]
    %v379 = vld [vmem:[#allocation7 + $0x3c8] sm:$0xff]
    %v380 = vld [vmem:[#allocation7 + $0x3d0] sm:$0xff]
    %v381 = vld [vmem:[#allocation7 + $0x3d8] sm:$0xff]
    %v382 = vld [vmem:[#allocation7 + $0x3e0] sm:$0xff]
    %v383 = vld [vmem:[#allocation7 + $0x3e8] sm:$0xff]
    %v384 = vld [vmem:[#allocation7 + $0x3f0] sm:$0xff]
    %v385 = vld [vmem:[#allocation7 + $0x3f8] sm:$0xff]
    %v386 = vld [vmem:[%s4] sm:$0x3]
    %v388 = vperm.slane %v386, 0
    %v389 = vperm.slane %v386, 1
    %392 = vmatpush.msra.mxu0 %v288
    %393 = vmatpush.msra.mxu0 %v286
    %394 = vmatpush.msra.mxu0 %v284
    %395 = vmatpush.msra.mxu0 %v282
    %396 = vmatpush.msra.mxu0 %v280
    %397 = vmatpush.msra.mxu0 %v278
    %398 = vmatpush.msra.mxu0 %v276
    %399 = vmatpush.msra.mxu0 %v274
    %400 = vmatpush.msra.mxu0 %v272
    %401 = vmatpush.msra.mxu0 %v270
    %402 = vmatpush.msra.mxu0 %v268
    %403 = vmatpush.msra.mxu0 %v266
    %404 = vmatpush.msra.mxu0 %v264
    %405 = vmatpush.msra.mxu0 %v262
    %406 = vmatpush.msra.mxu0 %v260
    %407 = vmatpush.msra.mxu0 %v258
    %408 = vmatmul.f32.gmra.mxu0 %v254
    %v409 = vpop.f32.mrf.mxu0
    %v410 = vadd.f32 %v388, %v409
    %411 = vdwg.mxu0
    %412 = vmatpush.msra.mxu0 %v320
    %413 = vmatpush.msra.mxu0 %v318
    %414 = vmatpush.msra.mxu0 %v316
    %415 = vmatpush.msra.mxu0 %v314
    %416 = vmatpush.msra.mxu0 %v312
    %417 = vmatpush.msra.mxu0 %v310
    %418 = vmatpush.msra.mxu0 %v308
    %419 = vmatpush.msra.mxu0 %v306
    %420 = vmatpush.msra.mxu0 %v304
    %421 = vmatpush.msra.mxu0 %v302
    %422 = vmatpush.msra.mxu0 %v300
    %423 = vmatpush.msra.mxu0 %v298
    %424 = vmatpush.msra.mxu0 %v296
    %425 = vmatpush.msra.mxu0 %v294
    %426 = vmatpush.msra.mxu0 %v292
    %427 = vmatpush.msra.mxu0 %v290
    %428 = vmatmul.f32.gmra.mxu0 %v255
    %v429 = vpop.f32.mrf.mxu0
    %v430 = vadd.f32 %v410, %v429
    %431 = vdwg.mxu0
    %432 = vmatpush.msra.mxu0 %v352
    %433 = vmatpush.msra.mxu0 %v350
    %434 = vmatpush.msra.mxu0 %v348
    %435 = vmatpush.msra.mxu0 %v346
    %436 = vmatpush.msra.mxu0 %v344
    %437 = vmatpush.msra.mxu0 %v342
    %438 = vmatpush.msra.mxu0 %v340
    %439 = vmatpush.msra.mxu0 %v338
    %440 = vmatpush.msra.mxu0 %v336
    %441 = vmatpush.msra.mxu0 %v334
    %442 = vmatpush.msra.mxu0 %v332
    %443 = vmatpush.msra.mxu0 %v330
    %444 = vmatpush.msra.mxu0 %v328
    %445 = vmatpush.msra.mxu0 %v326
    %446 = vmatpush.msra.mxu0 %v324
    %447 = vmatpush.msra.mxu0 %v322
    %448 = vmatmul.f32.gmra.mxu0 %v256
    %v449 = vpop.f32.mrf.mxu0
    %v450 = vadd.f32 %v430, %v449
    %451 = vdwg.mxu0
    %452 = vmatpush.msra.mxu0 %v384
    %453 = vmatpush.msra.mxu0 %v382
    %454 = vmatpush.msra.mxu0 %v380
    %455 = vmatpush.msra.mxu0 %v378
    %456 = vmatpush.msra.mxu0 %v376
    %457 = vmatpush.msra.mxu0 %v374
    %458 = vmatpush.msra.mxu0 %v372
    %459 = vmatpush.msra.mxu0 %v370
    %460 = vmatpush.msra.mxu0 %v368
    %461 = vmatpush.msra.mxu0 %v366
    %462 = vmatpush.msra.mxu0 %v364
    %463 = vmatpush.msra.mxu0 %v362
    %464 = vmatpush.msra.mxu0 %v360
    %465 = vmatpush.msra.mxu0 %v358
    %466 = vmatpush.msra.mxu0 %v356
    %467 = vmatpush.msra.mxu0 %v354
    %468 = vmatmul.f32.gmra.mxu0 %v257
    %v469 = vpop.f32.mrf.mxu0
    %v470 = vadd.f32 %v450, %v469
    %471 = vdwg.mxu0
    %472 = vmatpush.msra.mxu0 %v289
    %473 = vmatpush.msra.mxu0 %v287
    %474 = vmatpush.msra.mxu0 %v285
    %475 = vmatpush.msra.mxu0 %v283
    %476 = vmatpush.msra.mxu0 %v281
    %477 = vmatpush.msra.mxu0 %v279
    %478 = vmatpush.msra.mxu0 %v277
    %479 = vmatpush.msra.mxu0 %v275
    %480 = vmatpush.msra.mxu0 %v273
    %481 = vmatpush.msra.mxu0 %v271
    %482 = vmatpush.msra.mxu0 %v269
    %483 = vmatpush.msra.mxu0 %v267
    %484 = vmatpush.msra.mxu0 %v265
    %485 = vmatpush.msra.mxu0 %v263
    %486 = vmatpush.msra.mxu0 %v261
    %487 = vmatpush.msra.mxu0 %v259
    %488 = vmatmul.f32.gmra.mxu0 %v254
    %v489 = vpop.f32.mrf.mxu0
    %v490 = vadd.f32 %v389, %v489
    %491 = vdwg.mxu0
    %492 = vmatpush.msra.mxu0 %v321
    %493 = vmatpush.msra.mxu0 %v319
    %494 = vmatpush.msra.mxu0 %v317
    %495 = vmatpush.msra.mxu0 %v315
    %496 = vmatpush.msra.mxu0 %v313
    %497 = vmatpush.msra.mxu0 %v311
    %498 = vmatpush.msra.mxu0 %v309
    %499 = vmatpush.msra.mxu0 %v307
    %500 = vmatpush.msra.mxu0 %v305
    %501 = vmatpush.msra.mxu0 %v303
    %502 = vmatpush.msra.mxu0 %v301
    %503 = vmatpush.msra.mxu0 %v299
    %504 = vmatpush.msra.mxu0 %v297
    %505 = vmatpush.msra.mxu0 %v295
    %506 = vmatpush.msra.mxu0 %v293
    %507 = vmatpush.msra.mxu0 %v291
    %508 = vmatmul.f32.gmra.mxu0 %v255
    %v509 = vpop.f32.mrf.mxu0
    %v510 = vadd.f32 %v490, %v509
    %511 = vdwg.mxu0
    %512 = vmatpush.msra.mxu0 %v353
    %513 = vmatpush.msra.mxu0 %v351
    %514 = vmatpush.msra.mxu0 %v349
    %515 = vmatpush.msra.mxu0 %v347
    %516 = vmatpush.msra.mxu0 %v345
    %517 = vmatpush.msra.mxu0 %v343
    %518 = vmatpush.msra.mxu0 %v341
    %519 = vmatpush.msra.mxu0 %v339
    %520 = vmatpush.msra.mxu0 %v337
    %521 = vmatpush.msra.mxu0 %v335
    %522 = vmatpush.msra.mxu0 %v333
    %523 = vmatpush.msra.mxu0 %v331
    %524 = vmatpush.msra.mxu0 %v329
    %525 = vmatpush.msra.mxu0 %v327
    %526 = vmatpush.msra.mxu0 %v325
    %527 = vmatpush.msra.mxu0 %v323
    %528 = vmatmul.f32.gmra.mxu0 %v256
    %v529 = vpop.f32.mrf.mxu0
    %v530 = vadd.f32 %v510, %v529
    %531 = vdwg.mxu0
    %532 = vmatpush.msra.mxu0 %v385
    %533 = vmatpush.msra.mxu0 %v383
    %534 = vmatpush.msra.mxu0 %v381
    %535 = vmatpush.msra.mxu0 %v379
    %536 = vmatpush.msra.mxu0 %v377
    %537 = vmatpush.msra.mxu0 %v375
    %538 = vmatpush.msra.mxu0 %v373
    %539 = vmatpush.msra.mxu0 %v371
    %540 = vmatpush.msra.mxu0 %v369
    %541 = vmatpush.msra.mxu0 %v367
    %542 = vmatpush.msra.mxu0 %v365
    %543 = vmatpush.msra.mxu0 %v363
    %544 = vmatpush.msra.mxu0 %v361
    %545 = vmatpush.msra.mxu0 %v359
    %546 = vmatpush.msra.mxu0 %v357
    %547 = vmatpush.msra.mxu0 %v355
    %548 = vmatmul.f32.gmra.mxu0 %v257
    %v549 = vpop.f32.mrf.mxu0
    %v550 = vadd.f32 %v530, %v549
    %551 = vdwg.mxu0
    %v552 = vmax.f32 %v470, 0.0
    %v553 = vmax.f32 %v550, 0.0
    %v554 = vld [vmem:[#allocation9] sm:$0xff]
    %v555 = vld [vmem:[#allocation9 + $0x8] sm:$0xff]
    %v556 = vld [vmem:[#allocation9 + $0x10] sm:$0xff]
    %v557 = vld [vmem:[#allocation9 + $0x18] sm:$0xff]
    %v558 = vld [vmem:[#allocation9 + $0x20] sm:$0xff]
    %v559 = vld [vmem:[#allocation9 + $0x28] sm:$0xff]
    %v560 = vld [vmem:[#allocation9 + $0x30] sm:$0xff]
    %v561 = vld [vmem:[#allocation9 + $0x38] sm:$0xff]
    %v562 = vld [vmem:[#allocation9 + $0x40] sm:$0xff]
    %v563 = vld [vmem:[#allocation9 + $0x48] sm:$0xff]
    %v564 = vld [vmem:[#allocation9 + $0x50] sm:$0xff]
    %v565 = vld [vmem:[#allocation9 + $0x58] sm:$0xff]
    %v566 = vld [vmem:[#allocation9 + $0x60] sm:$0xff]
    %v567 = vld [vmem:[#allocation9 + $0x68] sm:$0xff]
    %v568 = vld [vmem:[#allocation9 + $0x70] sm:$0xff]
    %v569 = vld [vmem:[#allocation9 + $0x78] sm:$0xff]
    %v570 = vld [vmem:[#allocation9 + $0x80] sm:$0xff]
    %v571 = vld [vmem:[#allocation9 + $0x88] sm:$0xff]
    %v572 = vld [vmem:[#allocation9 + $0x90] sm:$0xff]
    %v573 = vld [vmem:[#allocation9 + $0x98] sm:$0xff]
    %v574 = vld [vmem:[#allocation9 + $0xa0] sm:$0xff]
    %v575 = vld [vmem:[#allocation9 + $0xa8] sm:$0xff]
    %v576 = vld [vmem:[#allocation9 + $0xb0] sm:$0xff]
    %v577 = vld [vmem:[#allocation9 + $0xb8] sm:$0xff]
    %v578 = vld [vmem:[#allocation9 + $0xc0] sm:$0xff]
    %v579 = vld [vmem:[#allocation9 + $0xc8] sm:$0xff]
    %v580 = vld [vmem:[#allocation9 + $0xd0] sm:$0xff]
    %v581 = vld [vmem:[#allocation9 + $0xd8] sm:$0xff]
    %v582 = vld [vmem:[#allocation9 + $0xe0] sm:$0xff]
    %v583 = vld [vmem:[#allocation9 + $0xe8] sm:$0xff]
    %v584 = vld [vmem:[#allocation9 + $0xf0] sm:$0xff]
    %v585 = vld [vmem:[#allocation9 + $0xf8] sm:$0xff]
    %v586 = vld [vmem:[%s6] sm:$0x1]
    %v588 = vperm.slane %v586, 0
    %590 = vmatpush.msra.mxu0 %v569
    %591 = vmatpush.msra.mxu0 %v568
    %592 = vmatpush.msra.mxu0 %v567
    %593 = vmatpush.msra.mxu0 %v566
    %594 = vmatpush.msra.mxu0 %v565
    %595 = vmatpush.msra.mxu0 %v564
    %596 = vmatpush.msra.mxu0 %v563
    %597 = vmatpush.msra.mxu0 %v562
    %598 = vmatpush.msra.mxu0 %v561
    %599 = vmatpush.msra.mxu0 %v560
    %600 = vmatpush.msra.mxu0 %v559
    %601 = vmatpush.msra.mxu0 %v558
    %602 = vmatpush.msra.mxu0 %v557
    %603 = vmatpush.msra.mxu0 %v556
    %604 = vmatpush.msra.mxu0 %v555
    %605 = vmatpush.msra.mxu0 %v554
    %606 = vmatmul.f32.gmra.mxu0 %v552
    %v607 = vpop.f32.mrf.mxu0
    %v608 = vadd.f32 %v588, %v607
    %609 = vdwg.mxu0
    %610 = vmatpush.msra.mxu0 %v585
    %611 = vmatpush.msra.mxu0 %v584
    %612 = vmatpush.msra.mxu0 %v583
    %613 = vmatpush.msra.mxu0 %v582
    %614 = vmatpush.msra.mxu0 %v581
    %615 = vmatpush.msra.mxu0 %v580
    %616 = vmatpush.msra.mxu0 %v579
    %617 = vmatpush.msra.mxu0 %v578
    %618 = vmatpush.msra.mxu0 %v577
    %619 = vmatpush.msra.mxu0 %v576
    %620 = vmatpush.msra.mxu0 %v575
    %621 = vmatpush.msra.mxu0 %v574
    %622 = vmatpush.msra.mxu0 %v573
    %623 = vmatpush.msra.mxu0 %v572
    %624 = vmatpush.msra.mxu0 %v571
    %625 = vmatpush.msra.mxu0 %v570
    %626 = vmatmul.f32.gmra.mxu0 %v553
    %v627 = vpop.f32.mrf.mxu0
    %v628 = vadd.f32 %v608, %v627
    %629 = vdwg.mxu0
    %v630 = vmax.f32 %v628, 0.0
    %v631 = vld [vmem:[#allocation10] sm:$0xff]
    %v632 = vld [vmem:[#allocation10 + $0x8] sm:$0xff]
    %v633 = vld [vmem:[#allocation10 + $0x10] sm:$0xff]
    %v634 = vld [vmem:[#allocation10 + $0x18] sm:$0xff]
    %v635 = vld [vmem:[#allocation10 + $0x20] sm:$0xff]
    %v636 = vld [vmem:[#allocation10 + $0x28] sm:$0xff]
    %v637 = vld [vmem:[#allocation10 + $0x30] sm:$0xff]
    %v638 = vld [vmem:[#allocation10 + $0x38] sm:$0xff]
    %v639 = vld [vmem:[#allocation10 + $0x40] sm:$0xff]
    %v640 = vld [vmem:[#allocation10 + $0x48] sm:$0xff]
    %v641 = vld [vmem:[#allocation10 + $0x50] sm:$0xff]
    %v642 = vld [vmem:[#allocation10 + $0x58] sm:$0xff]
    %v643 = vld [vmem:[#allocation10 + $0x60] sm:$0xff]
    %v644 = vld [vmem:[#allocation10 + $0x68] sm:$0xff]
    %v645 = vld [vmem:[#allocation10 + $0x70] sm:$0xff]
    %v646 = vld [vmem:[#allocation10 + $0x78] sm:$0xff]
    %v647 = vld [vmem:[%s8] sm:$0x1]
    %v649 = vperm.slane %v647, 0
    %651 = vmatpush.msra.mxu0 %v646
    %652 = vmatpush.msra.mxu0 %v645
    %653 = vmatpush.msra.mxu0 %v644
    %654 = vmatpush.msra.mxu0 %v643
    %655 = vmatpush.msra.mxu0 %v642
    %656 = vmatpush.msra.mxu0 %v641
    %657 = vmatpush.msra.mxu0 %v640
    %658 = vmatpush.msra.mxu0 %v639
    %659 = vmatpush.msra.mxu0 %v638
    %660 = vmatpush.msra.mxu0 %v637
    %661 = vmatpush.msra.mxu0 %v636
    %662 = vmatpush.msra.mxu0 %v635
    %663 = vmatpush.msra.mxu0 %v634
    %664 = vmatpush.msra.mxu0 %v633
    %665 = vmatpush.msra.mxu0 %v632
    %666 = vmatpush.msra.mxu0 %v631
    %667 = vmatmul.f32.gmra.mxu0 %v630
    %v668 = vpop.f32.mrf.mxu0
    %v669 = vadd.f32 %v649, %v668
    %670 = vdwg.mxu0
    %v671 = vmax.f32 %v669, 0.0
    %v672 = vld [vmem:[#allocation12] sm:$0xff]
    %v673 = vld [vmem:[#allocation12 + $0x8] sm:$0xff]
    %v674 = vld [vmem:[#allocation12 + $0x10] sm:$0xff]
    %v675 = vld [vmem:[#allocation12 + $0x18] sm:$0xff]
    %v676 = vld [vmem:[#allocation12 + $0x20] sm:$0xff]
    %v677 = vld [vmem:[#allocation12 + $0x28] sm:$0xff]
    %v678 = vld [vmem:[#allocation12 + $0x30] sm:$0xff]
    %v679 = vld [vmem:[#allocation12 + $0x38] sm:$0xff]
    %v680 = vld [vmem:[#allocation12 + $0x40] sm:$0xff]
    %v681 = vld [vmem:[#allocation12 + $0x48] sm:$0xff]
    %v682 = vld [vmem:[#allocation12 + $0x50] sm:$0xff]
    %v683 = vld [vmem:[#allocation12 + $0x58] sm:$0xff]
    %v684 = vld [vmem:[#allocation12 + $0x60] sm:$0xff]
    %v685 = vld [vmem:[#allocation12 + $0x68] sm:$0xff]
    %v686 = vld [vmem:[#allocation12 + $0x70] sm:$0xff]
    %v687 = vld [vmem:[#allocation12 + $0x78] sm:$0xff]
    %v688 = vld [vmem:[%s10] sm:$0x1]
    %v690 = vperm.slane %v688, 0
    %692 = vmatpush.msra.mxu0 %v687
    %693 = vmatpush.msra.mxu0 %v686
    %694 = vmatpush.msra.mxu0 %v685
    %695 = vmatpush.msra.mxu0 %v684
    %696 = vmatpush.msra.mxu0 %v683
    %697 = vmatpush.msra.mxu0 %v682
    %698 = vmatpush.msra.mxu0 %v681
    %699 = vmatpush.msra.mxu0 %v680
    %700 = vmatpush.msra.mxu0 %v679
    %701 = vmatpush.msra.mxu0 %v678
    %702 = vmatpush.msra.mxu0 %v677
    %703 = vmatpush.msra.mxu0 %v676
    %704 = vmatpush.msra.mxu0 %v675
    %705 = vmatpush.msra.mxu0 %v674
    %706 = vmatpush.msra.mxu0 %v673
    %707 = vmatpush.msra.mxu0 %v672
    %708 = vmatmul.f32.gmra.mxu0 %v671
    %v709 = vpop.f32.mrf.mxu0
    %v710 = vadd.f32 %v690, %v709
    %711 = vdwg.mxu0
    %v712 = vtanh.pop %v710
    %713 = vst [vmem:[%s11] sm:$0xf] %v712
    // Predicated region
    $region74: #{regressor_forward.1} parent=1 // pred_check
      _
    $region75: #{regressor_forward.1} parent=1 // pred_check_branch
      %715 = sbr.rel (0) target = $region77
    $region76: #{regressor_forward.1} parent=1 // pred_region
      _
    $region77: #{regressor_forward.1} parent=1 // pred_fallthru
      _
    // Predicated region
    $region78: #{regressor_forward.1} parent=1 // pred_check
      _
    $region79: #{regressor_forward.1} parent=1 // pred_check_branch
      %717 = sbr.rel (0) target = $region81
    $region80: #{regressor_forward.1} parent=1 // pred_region
      _
    $region81: #{regressor_forward.1} parent=1 // pred_fallthru
      _
    %718 = vsyncpa [#allocation3], 1
    %719 = vsyncpa [#allocation5], 1
    %720 = vsyncpa [#allocation8], 1
    %721 = vsyncpa [#allocation11], 1

</llo_original>
